<compile_context>
chip_gen: v5e
topology: v5e:2x2
jax: 0.10.0
libtpu: 0.0.40
codegen_flags: <defaults>
</compile_context>

<pallas_src>
import functools

import jax
import jax.numpy as jnp
from jax.experimental import pallas as pl
from jax.experimental.pallas import tpu as pltpu

LANE = 128
_NEG = -1e30  # masks invalid (partial-window) conv outputs before the max


def _round_up(x, m):
    return ((x + m - 1) // m) * m


def _cdiv(a, b):
    return (a + b - 1) // b


def textcnn_kernel(emb_ref, wconv_ref, bconv_ref, mask_ref, fcw_ref, fcb_ref,
                   out_ref, *, k_max, time_chunk):
    """Fused im2col-conv -> max-over-time -> bias+ReLU -> linear.

    emb_ref  : (S_tot, TB, D)    bf16  time-major, time zero-padded to S_tot
    wconv_ref: (k_max*D, C_pad)  bf16  all branches packed on the channel axis
    bconv_ref: (1, C_pad)        f32
    mask_ref : (L, C_pad)        f32   0 valid window, -1e30 invalid tail window
    fcw_ref  : (C_pad, NC_pad)   bf16
    fcb_ref  : (1, NC_pad)       f32
    out_ref  : (TB, NC_pad)      f32   lane-dense output block
    """
    S_tot, TB, D = emb_ref.shape
    KD, C_pad = wconv_ref.shape
    L = mask_ref.shape[0]

    def chunk_pool(c0, cl):
        # im2col LHS: k_max leading-axis tap slices concatenated on the lane
        # axis -> one lane-dense matmul; accumulation stays inside the MXU.
        taps = [emb_ref[c0 + j:c0 + j + cl] for j in range(k_max)]  # (cl,TB,D)
        lhs = jnp.concatenate(taps, axis=-1)                        # (cl,TB,KD)
        acc = jax.lax.dot_general(
            lhs.reshape(cl * TB, KD), wconv_ref[...],
            (((1,), (0,)), ((), ())),
            preferred_element_type=jnp.float32)                     # (cl*TB,C_pad)
        # Mask invalid tail windows of smaller-k branches, then leading-axis max.
        acc = acc.reshape(cl, TB, C_pad) + mask_ref[c0:c0 + cl][:, None, :]
        return jnp.max(acc, axis=0)                                 # (TB, C_pad)

    # Stream the time axis: running max keeps VMEM independent of S.
    tl = max(1, min(L, time_chunk))
    pooled = chunk_pool(0, tl)
    for c0 in range(tl, L, tl):
        pooled = jnp.maximum(pooled, chunk_pool(c0, min(tl, L - c0)))

    # Bias + ReLU AFTER max-over-time (exact rewrite; one (TB,C_pad) VPU pass).
    feat = jnp.maximum(pooled + bconv_ref[...], 0.0)

    # TODO(synk): nn.Dropout is identity in eval mode; no RNG dropout applied.
    out = jax.lax.dot_general(
        feat.astype(jnp.bfloat16), fcw_ref[...],
        (((1,), (0,)), ((), ())),
        preferred_element_type=jnp.float32)
    out_ref[...] = out + fcb_ref[...]


def _vmem_estimate(TB, S_tot, D, KD, C_pad, NC_pad, L, TL):
    bf16, f32 = 2, 4
    emb = 2 * TB * S_tot * D * bf16                 # double-buffered activations
    outb = 2 * TB * NC_pad * f32                    # double-buffered output
    weights = 2 * (KD * C_pad * bf16 + C_pad * f32 + L * C_pad * f32
                   + C_pad * NC_pad * bf16 + NC_pad * f32)
    live = TB * TL * (2 * KD * bf16 + C_pad * f32)  # taps + im2col lhs + f32 acc
    return emb + outb + weights + live


def textcnn_forward(tokens, emb_table, conv_ws, conv_bs, fc_w, fc_b,
                    kernel_sizes, num_channels, *, batch_tile=None,
                    time_chunk=512):
    """tokens: (seq_len, batch) int32 (PyTorch's (S, B) input order).

    conv_ws[i]: (k_i, emb_dim, num_channels); conv_bs[i]: (num_channels,)
    fc_w: (num_channels * n, num_classes); fc_b: (num_classes,)
    """
    kernel_sizes = [int(k) for k in kernel_sizes]
    n = len(kernel_sizes)
    C = int(num_channels)
    num_classes = fc_w.shape[1]

    # Embedding gather stays in plain JAX glue.
    # TODO(synk): could be fused into the kernel (scalar-prefetched ids + row DMA)
    # to save one HBM round-trip of the (S,B,D) activations.
    emb = emb_table[tokens]                          # (S, B, D), time-major kept
    S, B, D = emb.shape

    k_max, k_min = max(kernel_sizes), min(kernel_sizes)
    assert S >= k_max, "sequence shorter than largest conv kernel"
    L = S - k_min + 1                                # shared window count
    S_tot = S + (k_max - k_min)                      # zero-pad so all taps in-bounds

    C_tot = n * C
    C_pad = _round_up(max(C_tot, 1), LANE)
    NC_pad = _round_up(max(num_classes, 1), LANE)
    KD = k_max * D

    # Batch tile: even grid (>= 2 steps) so both v7x TensorCores do work; large
    # tiles for big batches amortize the ~0.35us per-grid-step overhead.
    B8 = _round_up(B, 8)
    if batch_tile is None:
        batch_tile = 8 if B8 <= 8 else min(512, _round_up(_cdiv(B8, 2), 8))
    TB = _round_up(min(int(batch_tile), B8), 8)

    # Shape-derived VMEM budget (v7x: 64 MiB physical, v5e/v6e: 128 MiB).
    try:
        cap = int(pltpu.get_tpu_info().vmem_capacity_bytes)
    except Exception:
        cap = 64 * 1024 * 1024                       # conservative (v7x)
    budget = max(cap - (16 << 20), 32 << 20)
    TL = max(1, min(L, int(time_chunk)))
    while TB > 8 and _vmem_estimate(TB, S_tot, D, KD, C_pad, NC_pad, L, TL) > budget:
        TB = max(8, _round_up(TB // 2, 8))
    vmem_limit = int(min(budget, max(
        _vmem_estimate(TB, S_tot, D, KD, C_pad, NC_pad, L, TL) + (8 << 20),
        32 << 20)))

    B_pad = _round_up(B8, TB)
    emb = jnp.pad(emb, ((0, S_tot - S), (0, B_pad - B), (0, 0)))
    emb = emb.astype(jnp.bfloat16)

    # Pack all branches into ONE 128-lane channel block (taps beyond a branch's
    # kernel size zeroed); build the invalid-window mask per branch.
    wconv = jnp.zeros((KD, C_pad), jnp.float32)
    bconv = jnp.zeros((1, C_pad), jnp.float32)
    mask = jnp.zeros((L, C_pad), jnp.float32)
    for i, (w, b, k) in enumerate(zip(conv_ws, conv_bs, kernel_sizes)):
        w = jnp.asarray(w, jnp.float32)
        wconv = wconv.at[:k * D, i * C:(i + 1) * C].set(w.reshape(k * D, C))
        bconv = bconv.at[0, i * C:(i + 1) * C].set(jnp.asarray(b, jnp.float32))
        L_i = S - k + 1
        if L_i < L:
            mask = mask.at[L_i:, i * C:(i + 1) * C].set(_NEG)
    wconv = wconv.astype(jnp.bfloat16)

    fcw = jnp.zeros((C_pad, NC_pad), jnp.float32)
    fcw = fcw.at[:C_tot, :num_classes].set(jnp.asarray(fc_w, jnp.float32))
    fcw = fcw.astype(jnp.bfloat16)
    fcb = jnp.zeros((1, NC_pad), jnp.float32).at[0, :num_classes].set(
        jnp.asarray(fc_b, jnp.float32))

    kernel = functools.partial(textcnn_kernel, k_max=k_max, time_chunk=TL)

    out = pl.pallas_call(
        kernel,
        out_shape=jax.ShapeDtypeStruct((B_pad, NC_pad), jnp.float32),
        grid=(B_pad // TB,),
        in_specs=[
            pl.BlockSpec((S_tot, TB, D), lambda i: (0, i, 0)),   # batch-tiled
            pl.BlockSpec((KD, C_pad), lambda i: (0, 0)),         # VMEM-resident
            pl.BlockSpec((1, C_pad), lambda i: (0, 0)),
            pl.BlockSpec((L, C_pad), lambda i: (0, 0)),
            pl.BlockSpec((C_pad, NC_pad), lambda i: (0, 0)),
            pl.BlockSpec((1, NC_pad), lambda i: (0, 0)),
        ],
        out_specs=pl.BlockSpec((TB, NC_pad), lambda i: (i, 0)),
        compiler_params=pltpu.CompilerParams(
            dimension_semantics=("parallel",),       # batch axis -> megacore
            vmem_limit_bytes=vmem_limit,
        ),
    )(emb, wconv, bconv, mask, fcw, fcb)

    return out[:B, :num_classes]


def reference_forward(tokens, emb_table, conv_ws, conv_bs, fc_w, fc_b,
                      kernel_sizes):
    """Pure-JAX f32 reference mirroring the PyTorch forward (eval mode)."""
    x = jnp.transpose(emb_table[tokens], (1, 0, 2))   # (B, S, D)
    B, S, D = x.shape
    pools = []
    for w, b, k in zip(conv_ws, conv_bs, kernel_sizes):
        L = S - k + 1
        acc = jnp.zeros((B, L, w.shape[2]), jnp.float32)
        for j in range(k):
            acc = acc + jnp.einsum('bld,dc->blc', x[:, j:j + L, :], w[j])
        acc = jax.nn.relu(acc + b[None, None, :])
        pools.append(jnp.max(acc, axis=1))
    feat = jnp.concatenate(pools, axis=1)
    # nn.Dropout is identity in eval mode.
    return feat @ fc_w + fc_b


if __name__ == "__main__":
    # Small, self-consistent hyperparameters (mirrors the params dict).
    vocab_size = 50
    emb_dim = 32
    num_channels = 8
    kernel_sizes = [2, 3, 4]
    num_classes = 4
    seq_len = 16
    batch = 16            # auto batch_tile -> TB=8, grid=(2,): even, pipelined

    key = jax.random.PRNGKey(0)
    keys = jax.random.split(key, 4 + 2 * len(kernel_sizes))
    k_emb, k_tok, k_fc, k_fcb = keys[:4]
    k_convs = keys[4:]

    emb_table = jax.random.normal(k_emb, (vocab_size, emb_dim), jnp.float32)
    tokens = jax.random.randint(k_tok, (seq_len, batch), 0, vocab_size, jnp.int32)

    conv_ws, conv_bs = [], []
    for i, k in enumerate(kernel_sizes):
        conv_ws.append(0.1 * jax.random.normal(
            k_convs[2 * i], (k, emb_dim, num_channels), jnp.float32))
        conv_bs.append(0.1 * jax.random.normal(
            k_convs[2 * i + 1], (num_channels,), jnp.float32))

    fc_w = 0.1 * jax.random.normal(
        k_fc, (num_channels * len(kernel_sizes), num_classes), jnp.float32)
    fc_b = 0.1 * jax.random.normal(k_fcb, (num_classes,), jnp.float32)

    out = textcnn_forward(tokens, emb_table, conv_ws, conv_bs, fc_w, fc_b,
                          kernel_sizes, num_channels)
    out = jax.block_until_ready(out)

    ref = reference_forward(tokens, emb_table, conv_ws, conv_bs, fc_w, fc_b,
                            kernel_sizes)
    assert out.shape == (batch, num_classes)
    # bf16 matmul inputs (f32 accumulation) -> looser tolerance than pure f32.
    assert jnp.allclose(out, ref, atol=2e-2, rtol=2e-2), (out, ref)

    print("KERNEL_OK")
</pallas_src>

<mosaic_0001>
module attributes {stable_mosaic.version = 11 : i64} {
  func.func @textcnn_kernel(%arg0: i32, %arg1: memref<18x8x32xbf16, #tpu.memory_space<vmem>>, %arg2: memref<128x128xbf16, #tpu.memory_space<vmem>>, %arg3: memref<1x128xf32, #tpu.memory_space<vmem>>, %arg4: memref<15x128xf32, #tpu.memory_space<vmem>>, %arg5: memref<128x128xbf16, #tpu.memory_space<vmem>>, %arg6: memref<1x128xf32, #tpu.memory_space<vmem>>, %arg7: memref<8x128xf32, #tpu.memory_space<vmem>>) attributes {dimension_semantics = [#tpu.dimension_semantics<parallel>], iteration_bounds = array<i64: 2>, scalar_prefetch = 0 : i64, scratch_operands = 0 : i64, tpu.core_type = #tpu.core_type<tc>, window_params = [{transform_indices = @transform_0, window_bounds = array<i64: 18, 8, 32>}, {pipeline_mode = #tpu.pipeline_mode<synchronous>, transform_indices = @transform_1, window_bounds = array<i64: 128, 128>}, {pipeline_mode = #tpu.pipeline_mode<synchronous>, transform_indices = @transform_2, window_bounds = array<i64: 1, 128>}, {pipeline_mode = #tpu.pipeline_mode<synchronous>, transform_indices = @transform_3, window_bounds = array<i64: 15, 128>}, {pipeline_mode = #tpu.pipeline_mode<synchronous>, transform_indices = @transform_4, window_bounds = array<i64: 128, 128>}, {pipeline_mode = #tpu.pipeline_mode<synchronous>, transform_indices = @transform_5, window_bounds = array<i64: 1, 128>}, {transform_indices = @transform_6, window_bounds = array<i64: 8, 128>}]} {
    %c0 = arith.constant 0 : index
    %c0_0 = arith.constant 0 : index
    %c0_1 = arith.constant 0 : index
    %0 = vector.load %arg1[%c0, %c0_0, %c0_1] : memref<18x8x32xbf16, #tpu.memory_space<vmem>>, vector<15x8x32xbf16>
    %c1 = arith.constant 1 : index
    %c0_2 = arith.constant 0 : index
    %c0_3 = arith.constant 0 : index
    %1 = vector.load %arg1[%c1, %c0_2, %c0_3] : memref<18x8x32xbf16, #tpu.memory_space<vmem>>, vector<15x8x32xbf16>
    %c2 = arith.constant 2 : index
    %c0_4 = arith.constant 0 : index
    %c0_5 = arith.constant 0 : index
    %2 = vector.load %arg1[%c2, %c0_4, %c0_5] : memref<18x8x32xbf16, #tpu.memory_space<vmem>>, vector<15x8x32xbf16>
    %c3 = arith.constant 3 : index
    %c0_6 = arith.constant 0 : index
    %c0_7 = arith.constant 0 : index
    %3 = vector.load %arg1[%c3, %c0_6, %c0_7] : memref<18x8x32xbf16, #tpu.memory_space<vmem>>, vector<15x8x32xbf16>
    %4 = tpu.concatenate %0, %1, %2, %3 in 2 : vector<15x8x32xbf16>, vector<15x8x32xbf16>, vector<15x8x32xbf16>, vector<15x8x32xbf16> -> vector<15x8x128xbf16>
    %5 = vector.shape_cast %4 : vector<15x8x128xbf16> to vector<120x128xbf16>
    %c0_8 = arith.constant 0 : index
    %c0_9 = arith.constant 0 : index
    %6 = vector.load %arg2[%c0_8, %c0_9] : memref<128x128xbf16, #tpu.memory_space<vmem>>, vector<128x128xbf16>
    %cst = arith.constant dense<0.000000e+00> : vector<120x128xf32>
    %7 = tpu.matmul %5, %6, %cst {dimension_numbers = #tpu.dot_dimension_numbers<[1], [0], [0], [1], [0, 0, 1, 1], [], []>} : vector<120x128xbf16>, vector<128x128xbf16>, vector<120x128xf32> -> vector<120x128xf32>
    %8 = vector.shape_cast %7 : vector<120x128xf32> to vector<15x8x128xf32>
    %c0_10 = arith.constant 0 : index
    %c0_11 = arith.constant 0 : index
    %9 = vector.load %arg4[%c0_10, %c0_11] : memref<15x128xf32, #tpu.memory_space<vmem>>, vector<15x128xf32>
    %10 = vector.shape_cast %9 : vector<15x128xf32> to vector<15x1x128xf32>
    %11 = vector.broadcast %10 : vector<15x1x128xf32> to vector<15x8x128xf32>
    %12 = arith.addf %8, %11 : vector<15x8x128xf32>
    %cst_12 = arith.constant dense<0xFF800000> : vector<8x128xf32>
    %13 = vector.multi_reduction <maximumf>, %12, %cst_12 [0] : vector<15x8x128xf32> to vector<8x128xf32>
    %c0_13 = arith.constant 0 : index
    %c0_14 = arith.constant 0 : index
    %14 = vector.load %arg3[%c0_13, %c0_14] : memref<1x128xf32, #tpu.memory_space<vmem>>, vector<1x128xf32>
    %15 = vector.broadcast %14 : vector<1x128xf32> to vector<8x128xf32>
    %16 = arith.addf %13, %15 : vector<8x128xf32>
    %cst_15 = arith.constant 0.000000e+00 : f32
    %17 = vector.broadcast %cst_15 : f32 to vector<8x128xf32>
    %18 = arith.maximumf %16, %17 : vector<8x128xf32>
    %19 = arith.truncf %18 : vector<8x128xf32> to vector<8x128xbf16>
    %c0_16 = arith.constant 0 : index
    %c0_17 = arith.constant 0 : index
    %20 = vector.load %arg5[%c0_16, %c0_17] : memref<128x128xbf16, #tpu.memory_space<vmem>>, vector<128x128xbf16>
    %cst_18 = arith.constant dense<0.000000e+00> : vector<8x128xf32>
    %21 = tpu.matmul %19, %20, %cst_18 {dimension_numbers = #tpu.dot_dimension_numbers<[1], [0], [0], [1], [0, 0, 1, 1], [], []>} : vector<8x128xbf16>, vector<128x128xbf16>, vector<8x128xf32> -> vector<8x128xf32>
    %c0_19 = arith.constant 0 : index
    %c0_20 = arith.constant 0 : index
    %22 = vector.load %arg6[%c0_19, %c0_20] : memref<1x128xf32, #tpu.memory_space<vmem>>, vector<1x128xf32>
    %23 = vector.broadcast %22 : vector<1x128xf32> to vector<8x128xf32>
    %24 = arith.addf %21, %23 : vector<8x128xf32>
    %c0_21 = arith.constant 0 : index
    %c0_22 = arith.constant 0 : index
    %25 = vector.load %arg7[%c0_21, %c0_22] : memref<8x128xf32, #tpu.memory_space<vmem>>, vector<8x128xf32>
    tpu.vector_store %arg7[%c0_21, %c0_22], %24 {strides = array<i32>} : memref<8x128xf32, #tpu.memory_space<vmem>>, vector<8x128xf32>,
    return
  }
  func.func @transform_0(%arg0: i32) -> (i32, i32, i32) {
    %c0_i32 = arith.constant 0 : i32
    %c0_i32_0 = arith.constant 0 : i32
    %c0_i32_1 = arith.constant 0 : i32
    return %c0_i32, %arg0, %c0_i32_0 : i32, i32, i32
  }
  func.func @transform_1(%arg0: i32) -> (i32, i32) {
    %c0_i32 = arith.constant 0 : i32
    %c0_i32_0 = arith.constant 0 : i32
    %c0_i32_1 = arith.constant 0 : i32
    return %c0_i32, %c0_i32_0 : i32, i32
  }
  func.func @transform_2(%arg0: i32) -> (i32, i32) {
    %c0_i32 = arith.constant 0 : i32
    %c0_i32_0 = arith.constant 0 : i32
    %c0_i32_1 = arith.constant 0 : i32
    return %c0_i32, %c0_i32_0 : i32, i32
  }
  func.func @transform_3(%arg0: i32) -> (i32, i32) {
    %c0_i32 = arith.constant 0 : i32
    %c0_i32_0 = arith.constant 0 : i32
    %c0_i32_1 = arith.constant 0 : i32
    return %c0_i32, %c0_i32_0 : i32, i32
  }
  func.func @transform_4(%arg0: i32) -> (i32, i32) {
    %c0_i32 = arith.constant 0 : i32
    %c0_i32_0 = arith.constant 0 : i32
    %c0_i32_1 = arith.constant 0 : i32
    return %c0_i32, %c0_i32_0 : i32, i32
  }
  func.func @transform_5(%arg0: i32) -> (i32, i32) {
    %c0_i32 = arith.constant 0 : i32
    %c0_i32_0 = arith.constant 0 : i32
    %c0_i32_1 = arith.constant 0 : i32
    return %c0_i32, %c0_i32_0 : i32, i32
  }
  func.func @transform_6(%arg0: i32) -> (i32, i32) {
    %c0_i32 = arith.constant 0 : i32
    %c0_i32_0 = arith.constant 0 : i32
    return %arg0, %c0_i32 : i32, i32
  }
}

</mosaic_0001>

<llo_original>
// kernel: tpu_custom_call.1
$region0: #{tpu_custom_call.1}
  #allocation0 [shape = 'u32[]', space=smem, size = 0x4, offset = 0x4, fixed_abs, tag = 'smem constant byte address 0x4 - core index']
  #allocation1 [shape = 'u32[72,128]{1,0:T(1,128)}', space=vmem, size = 0x9000, scoped, tag = 'internal scratch']
  %s0 = inlined_call_operand.hbm [shape: bf16[18,16,32], index: 0, kind: input, shape index: {}]
  %s1 = inlined_call_operand.hbm [shape: bf16[128,128], index: 1, kind: input, shape index: {}]
  %s2 = inlined_call_operand.vmem [shape: f32[1,128], index: 2, kind: input, shape index: {}]
  %s3 = inlined_call_operand.hbm [shape: f32[15,128], index: 3, kind: input, shape index: {}]
  %s4 = inlined_call_operand.hbm [shape: bf16[128,128], index: 4, kind: input, shape index: {}]
  %s5 = inlined_call_operand.vmem [shape: f32[1,128], index: 5, kind: input, shape index: {}]
  %s6 = inlined_call_operand.hbm [shape: f32[16,128], index: 6, kind: output, shape index: {}]
  %s7 = sld [smem:[#allocation0]]
  $region73: #{tpu_custom_call.1} parent=0
    _
  %s9 = ssub.s32 1, %s7
  %s10 = scalar_select 0, %s9, %s7
  $region1: #{tpu_custom_call.1} parent=0
    #allocation2 [shape = 'u8[73728]{0}', space=vmem, size = 0x12000, scoped, tag = 'input window, operand 0']
    #allocation3 [shape = 's32[2]{0}', space=sflag, size = 0x8, scoped, tag = 'scoped memory for tpu_custom_call.1']
    #allocation4 [shape = 's32[2]{0}', space=sflag, size = 0x8, scoped, tag = 'scoped memory for tpu_custom_call.1']
    #allocation5 [shape = 'u8[32768]{0}', space=vmem, size = 0x8000, scoped, tag = 'input window, operand 1, single buffered']
    #allocation6 [shape = 's32[1]{0}', space=sflag, size = 0x4, scoped, tag = 'scoped memory for tpu_custom_call.1']
    #allocation7 [shape = 'u8[8192]{0}', space=vmem, size = 0x2000, scoped, tag = 'input window, operand 3, single buffered']
    #allocation8 [shape = 'u8[32768]{0}', space=vmem, size = 0x8000, scoped, tag = 'input window, operand 4, single buffered']
    #allocation9 [shape = 's32[1]{0}', space=sflag, size = 0x4, scoped, tag = 'scoped memory for tpu_custom_call.1']
    #allocation10 [shape = 'u8[8192]{0}', space=vmem, size = 0x2000, scoped, tag = 'output window, operand 0']
    %11 = vsyncpa [#allocation3], 0
    %s12 = scalar_lea.sflag [#allocation3], 1
    %13 = vsyncpa %s12, 0
    %14 = vsyncpa [#allocation6], 0
    %15 = vsyncpa [#allocation9], 0
    %16 = vsyncpa [#allocation4], 0
    %s17 = scalar_lea.sflag [#allocation4], 1
    %18 = vsyncpa %s17, 0
    loop: start=0, step=1, limit=4
    $region2: #{tpu_custom_call.1} parent=1 // loop_pre_header
      _
    $region3: #{tpu_custom_call.1} parent=1 // loop_header
      %s20 = sphi 0, %s24
      %p21 = scmp.ge.s32.totalorder %s20, 4
      %s30 = sphi 0, %s32
      %s33 = sphi 0, %s30
      %s34 = sphi 0, %s33
      %s50 = sphi 0, %s34
      %s54 = sphi 0, %s54
      %s56 = sphi 0, %s54
      %s57 = sphi 0, %s56
      %s71 = sphi 0, %s57
      %s75 = sphi 0, %s75
      %s77 = sphi 0, %s75
      %s78 = sphi 0, %s77
      %s92 = sphi 0, %s78
      %s96 = sphi 0, %s96
      %s98 = sphi 0, %s96
      %s99 = sphi 0, %s98
      %s113 = sphi 0, %s99
      %s117 = sphi 0, %s117
      %s119 = sphi 0, %s117
      %s120 = sphi 0, %s119
      %s134 = sphi 0, %s120
      %s138 = sphi 0, %s138
      %s140 = sphi 0, %s138
      %s141 = sphi 0, %s140
      %s155 = sphi 0, %s141
      %s161 = sphi 0, %s163
      %s164 = sphi 0, %s161
      %s165 = sphi 0, %s164
      %s181 = sphi 0, %s165
    $region4: #{tpu_custom_call.1} parent=1 // loop_header_branch
      %23 = sbr.rel (%p21) target = $region8
    $region5: #{tpu_custom_call.1} parent=1 // loop_body
      %s25 = ssub.s32 %s20, 1
      %s26 = ssub.s32 %s20, 2
      %s27 = sadd.s32 %s20, 1
      %s28 = ssub.s32 %s20, %s27
      %p29 = scmp.eq.s32.totalorder %s28, 0
      %s31 = sadd.s32 %s30, 1
      %s32 = scalar_select %p29, %s30, %s31
      %p35 = pneg %p29
      %p36 = scmp.eq.s32.totalorder %s20, 1
      %p37 = por %p35, %p36
      %p38 = scmp.ne.s32.totalorder %s30, %s33
      %p39 = scmp.eq.s32.totalorder %s20, 0
      %p40 = por %p38, %p39
      %p41 = scmp.ne.s32.totalorder %s30, %s33
      %p42 = scmp.eq.s32.totalorder %s25, 1
      %p43 = por %p41, %p42
      %p44 = scmp.ne.s32.totalorder %s33, %s34
      %p45 = scmp.eq.s32.totalorder %s25, 0
      %p46 = por %p44, %p45
      %p47 = scmp.ne.s32.totalorder %s33, %s34
      %p48 = scmp.eq.s32.totalorder %s26, 1
      %p49 = por %p47, %p48
      %p51 = scmp.ne.s32.totalorder %s34, %s50
      %p52 = scmp.eq.s32.totalorder %s26, 0
      %p53 = por %p51, %p52
      %s55 = sadd.s32 %s54, 1
      %p58 = scmp.eq.s32.totalorder %s20, 1
      %p59 = scmp.ne.s32.totalorder %s54, %s56
      %p60 = scmp.eq.s32.totalorder %s20, 0
      %p61 = por %p59, %p60
      %p62 = scmp.ne.s32.totalorder %s54, %s56
      %p63 = scmp.eq.s32.totalorder %s25, 1
      %p64 = por %p62, %p63
      %p65 = scmp.ne.s32.totalorder %s56, %s57
      %p66 = scmp.eq.s32.totalorder %s25, 0
      %p67 = por %p65, %p66
      %p68 = scmp.ne.s32.totalorder %s56, %s57
      %p69 = scmp.eq.s32.totalorder %s26, 1
      %p70 = por %p68, %p69
      %p72 = scmp.ne.s32.totalorder %s57, %s71
      %p73 = scmp.eq.s32.totalorder %s26, 0
      %p74 = por %p72, %p73
      %s76 = sadd.s32 %s75, 1
      %p79 = scmp.eq.s32.totalorder %s20, 1
      %p80 = scmp.ne.s32.totalorder %s75, %s77
      %p81 = scmp.eq.s32.totalorder %s20, 0
      %p82 = por %p80, %p81
      %p83 = scmp.ne.s32.totalorder %s75, %s77
      %p84 = scmp.eq.s32.totalorder %s25, 1
      %p85 = por %p83, %p84
      %p86 = scmp.ne.s32.totalorder %s77, %s78
      %p87 = scmp.eq.s32.totalorder %s25, 0
      %p88 = por %p86, %p87
      %p89 = scmp.ne.s32.totalorder %s77, %s78
      %p90 = scmp.eq.s32.totalorder %s26, 1
      %p91 = por %p89, %p90
      %p93 = scmp.ne.s32.totalorder %s78, %s92
      %p94 = scmp.eq.s32.totalorder %s26, 0
      %p95 = por %p93, %p94
      %s97 = sadd.s32 %s96, 1
      %p100 = scmp.eq.s32.totalorder %s20, 1
      %p101 = scmp.ne.s32.totalorder %s96, %s98
      %p102 = scmp.eq.s32.totalorder %s20, 0
      %p103 = por %p101, %p102
      %p104 = scmp.ne.s32.totalorder %s96, %s98
      %p105 = scmp.eq.s32.totalorder %s25, 1
      %p106 = por %p104, %p105
      %p107 = scmp.ne.s32.totalorder %s98, %s99
      %p108 = scmp.eq.s32.totalorder %s25, 0
      %p109 = por %p107, %p108
      %p110 = scmp.ne.s32.totalorder %s98, %s99
      %p111 = scmp.eq.s32.totalorder %s26, 1
      %p112 = por %p110, %p111
      %p114 = scmp.ne.s32.totalorder %s99, %s113
      %p115 = scmp.eq.s32.totalorder %s26, 0
      %p116 = por %p114, %p115
      %s118 = sadd.s32 %s117, 1
      %p121 = scmp.eq.s32.totalorder %s20, 1
      %p122 = scmp.ne.s32.totalorder %s117, %s119
      %p123 = scmp.eq.s32.totalorder %s20, 0
      %p124 = por %p122, %p123
      %p125 = scmp.ne.s32.totalorder %s117, %s119
      %p126 = scmp.eq.s32.totalorder %s25, 1
      %p127 = por %p125, %p126
      %p128 = scmp.ne.s32.totalorder %s119, %s120
      %p129 = scmp.eq.s32.totalorder %s25, 0
      %p130 = por %p128, %p129
      %p131 = scmp.ne.s32.totalorder %s119, %s120
      %p132 = scmp.eq.s32.totalorder %s26, 1
      %p133 = por %p131, %p132
      %p135 = scmp.ne.s32.totalorder %s120, %s134
      %p136 = scmp.eq.s32.totalorder %s26, 0
      %p137 = por %p135, %p136
      %s139 = sadd.s32 %s138, 1
      %p142 = scmp.eq.s32.totalorder %s20, 1
      %p143 = scmp.ne.s32.totalorder %s138, %s140
      %p144 = scmp.eq.s32.totalorder %s20, 0
      %p145 = por %p143, %p144
      %p146 = scmp.ne.s32.totalorder %s138, %s140
      %p147 = scmp.eq.s32.totalorder %s25, 1
      %p148 = por %p146, %p147
      %p149 = scmp.ne.s32.totalorder %s140, %s141
      %p150 = scmp.eq.s32.totalorder %s25, 0
      %p151 = por %p149, %p150
      %p152 = scmp.ne.s32.totalorder %s140, %s141
      %p153 = scmp.eq.s32.totalorder %s26, 1
      %p154 = por %p152, %p153
      %p156 = scmp.ne.s32.totalorder %s141, %s155
      %p157 = scmp.eq.s32.totalorder %s26, 0
      %p158 = por %p156, %p157
      %s159 = ssub.s32 %s20, %s27
      %p160 = scmp.eq.s32.totalorder %s159, 0
      %s162 = sadd.s32 %s161, 1
      %s163 = scalar_select %p160, %s161, %s162
      %p166 = pneg %p160
      %p167 = scmp.eq.s32.totalorder %s20, 1
      %p168 = por %p166, %p167
      %p169 = scmp.ne.s32.totalorder %s161, %s164
      %p170 = scmp.eq.s32.totalorder %s20, 0
      %p171 = por %p169, %p170
      %p172 = scmp.ne.s32.totalorder %s161, %s164
      %p173 = scmp.eq.s32.totalorder %s25, 1
      %p174 = por %p172, %p173
      %p175 = scmp.ne.s32.totalorder %s164, %s165
      %p176 = scmp.eq.s32.totalorder %s25, 0
      %p177 = por %p175, %p176
      %p178 = scmp.ne.s32.totalorder %s164, %s165
      %p179 = scmp.eq.s32.totalorder %s26, 1
      %p180 = por %p178, %p179
      %p182 = scmp.ne.s32.totalorder %s165, %s181
      %p183 = scmp.eq.s32.totalorder %s26, 0
      %p184 = por %p182, %p183
      %p185 = scmp.le.s32.totalorder 1, %s20
      %p186 = scmp.lt.s32.totalorder %s20, 3
      %p187 = pnand %p185, %p186
      %p188 = pneg %p187
      // Predicated region
      $region9: #{tpu_custom_call.1} parent=5 // pred_check
        _
      $region10: #{tpu_custom_call.1} parent=5 // pred_check_branch
        %190 = sbr.rel (%p187) target = $region12
      $region11: #{tpu_custom_call.1} parent=5 // pred_region
        %s191 = ssub.s32 %s20, 1
        // Predicated region
        $region13: #{tpu_custom_call.1} parent=11 // pred_check
          %p192 = pneg %p67
        $region14: #{tpu_custom_call.1} parent=11 // pred_check_branch
          %194 = sbr.rel (%p192) target = $region16
        $region15: #{tpu_custom_call.1} parent=11 // pred_region
          %196 = vsyncadd [#allocation6], 0
          %s197 = sshll.u32 %s1, 4
          %s198 = int_to_ptr.hbm [resolvable:$true] %s197
          %s199 = sshll.u32 [#allocation5], 4
          %s200 = int_to_ptr.vmem [resolvable:$true] %s199
          %205 = dma.hbm_to_vmem [thread:$0]  %s198, 1024, %s200, [#allocation6], 64, 64, 4
        $region16: #{tpu_custom_call.1} parent=11 // pred_fallthru
          _
        // Predicated region
        $region17: #{tpu_custom_call.1} parent=11 // pred_check
          %p206 = pneg %p88
        $region18: #{tpu_custom_call.1} parent=11 // pred_check_branch
          %208 = sbr.rel (%p206) target = $region20
        $region19: #{tpu_custom_call.1} parent=11 // pred_region
          _
        $region20: #{tpu_custom_call.1} parent=11 // pred_fallthru
          _
        // Predicated region
        $region21: #{tpu_custom_call.1} parent=11 // pred_check
          %p209 = pneg %p109
        $region22: #{tpu_custom_call.1} parent=11 // pred_check_branch
          %211 = sbr.rel (%p209) target = $region24
        $region23: #{tpu_custom_call.1} parent=11 // pred_region
          %213 = vsyncadd [#allocation6], 0
          %s214 = sshll.u32 %s3, 4
          %s215 = int_to_ptr.hbm [resolvable:$true] %s214
          %s216 = sshll.u32 [#allocation7], 4
          %s217 = int_to_ptr.vmem [resolvable:$true] %s216
          %222 = dma.hbm_to_vmem [thread:$0]  %s215, 256, %s217, [#allocation6], 128, 128, 8
        $region24: #{tpu_custom_call.1} parent=11 // pred_fallthru
          _
        // Predicated region
        $region25: #{tpu_custom_call.1} parent=11 // pred_check
          %p223 = pneg %p130
        $region26: #{tpu_custom_call.1} parent=11 // pred_check_branch
          %225 = sbr.rel (%p223) target = $region28
        $region27: #{tpu_custom_call.1} parent=11 // pred_region
          %227 = vsyncadd [#allocation9], 0
          %s228 = sshll.u32 %s4, 4
          %s229 = int_to_ptr.hbm [resolvable:$true] %s228
          %s230 = sshll.u32 [#allocation8], 4
          %s231 = int_to_ptr.vmem [resolvable:$true] %s230
          %236 = dma.hbm_to_vmem [thread:$0]  %s229, 1024, %s231, [#allocation9], 64, 64, 4
        $region28: #{tpu_custom_call.1} parent=11 // pred_fallthru
          _
        // Predicated region
        $region29: #{tpu_custom_call.1} parent=11 // pred_check
          %p237 = pneg %p151
        $region30: #{tpu_custom_call.1} parent=11 // pred_check_branch
          %239 = sbr.rel (%p237) target = $region32
        $region31: #{tpu_custom_call.1} parent=11 // pred_region
          _
        $region32: #{tpu_custom_call.1} parent=11 // pred_fallthru
          _
      $region12: #{tpu_custom_call.1} parent=5 // pred_fallthru
        _
      %p240 = scmp.lt.s32.totalorder %s20, 2
      // Predicated region
      $region33: #{tpu_custom_call.1} parent=5 // pred_check
        %p241 = pneg %p240
      $region34: #{tpu_custom_call.1} parent=5 // pred_check_branch
        %243 = sbr.rel (%p241) target = $region36
      $region35: #{tpu_custom_call.1} parent=5 // pred_region
        // Predicated region
        $region37: #{tpu_custom_call.1} parent=35 // pred_check
          %p244 = pneg %p40
        $region38: #{tpu_custom_call.1} parent=35 // pred_check_branch
          %246 = sbr.rel (%p244) target = $region40
        $region39: #{tpu_custom_call.1} parent=35 // pred_region
          %s247 = sand.u32 %s30, 1
          %s248 = scalar_lea.sflag [#allocation3], %s247
          %s249 = sand.u32 %s30, 1
          %s250 = smul.addr %s249, 72
          %s251 = scalar_lea.vmem [#allocation2], %s250
          %253 = vsyncadd %s248, 0
          %s254 = smul.addr %s20, 4
          %s255 = scalar_lea.hbm %s0, %s254
          %s256 = sshll.u32 %s255, 4
          %s257 = int_to_ptr.hbm [resolvable:$true] %s256
          %s258 = sshll.u32 %s251, 4
          %s259 = int_to_ptr.vmem [resolvable:$true] %s258
          %264 = dma.hbm_to_vmem [thread:$0]  %s257, 1152, %s259, %s248, 128, 64, 4
        $region40: #{tpu_custom_call.1} parent=35 // pred_fallthru
          _
      $region36: #{tpu_custom_call.1} parent=5 // pred_fallthru
        _
      %p265 = scmp.le.s32.totalorder 1, %s20
      %p266 = scmp.lt.s32.totalorder %s20, 3
      %p267 = pnand %p265, %p266
      %p268 = pneg %p267
      // Predicated region
      $region41: #{tpu_custom_call.1} parent=5 // pred_check
        _
      $region42: #{tpu_custom_call.1} parent=5 // pred_check_branch
        %270 = sbr.rel (%p267) target = $region44
      $region43: #{tpu_custom_call.1} parent=5 // pred_region
        %s271 = ssub.s32 %s20, 1
        %s272 = sand.u32 %s33, 1
        %s273 = scalar_lea.sflag [#allocation3], %s272
        %s274 = sand.u32 %s33, 1
        %s275 = smul.addr %s274, 72
        %s276 = scalar_lea.vmem [#allocation2], %s275
        // Predicated region
        $region45: #{tpu_custom_call.1} parent=43 // pred_check
          %p277 = pneg %p46
        $region46: #{tpu_custom_call.1} parent=43 // pred_check_branch
          %279 = sbr.rel (%p277) target = $region48
        $region47: #{tpu_custom_call.1} parent=43 // pred_region
          %281 = dma.done %s273, 1152
        $region48: #{tpu_custom_call.1} parent=43 // pred_fallthru
          _
        // Predicated region
        $region49: #{tpu_custom_call.1} parent=43 // pred_check
          %p282 = pneg %p67
        $region50: #{tpu_custom_call.1} parent=43 // pred_check_branch
          %284 = sbr.rel (%p282) target = $region52
        $region51: #{tpu_custom_call.1} parent=43 // pred_region
          %286 = dma.done [#allocation6], 1024
        $region52: #{tpu_custom_call.1} parent=43 // pred_fallthru
          _
        // Predicated region
        $region53: #{tpu_custom_call.1} parent=43 // pred_check
          %p287 = pneg %p109
        $region54: #{tpu_custom_call.1} parent=43 // pred_check_branch
          %289 = sbr.rel (%p287) target = $region56
        $region55: #{tpu_custom_call.1} parent=43 // pred_region
          %291 = dma.done [#allocation6], 256
        $region56: #{tpu_custom_call.1} parent=43 // pred_fallthru
          _
        // Predicated region
        $region57: #{tpu_custom_call.1} parent=43 // pred_check
          %p292 = pneg %p130
        $region58: #{tpu_custom_call.1} parent=43 // pred_check_branch
          %294 = sbr.rel (%p292) target = $region60
        $region59: #{tpu_custom_call.1} parent=43 // pred_region
          %296 = dma.done [#allocation9], 1024
        $region60: #{tpu_custom_call.1} parent=43 // pred_fallthru
          _
        %s297 = sand.u32 %s33, 1
        %s298 = scalar_lea.sflag [#allocation3], %s297
        %s299 = sand.u32 %s33, 1
        %s300 = smul.addr %s299, 72
        %s301 = scalar_lea.vmem [#allocation2], %s300
        %p302 = pneg %p46
        %p303 = pneg %p43
        %p304 = pneg %p67
        %p305 = pneg %p64
        %p306 = pneg %p88
        %p307 = pneg %p85
        %p308 = pneg %p109
        %p309 = pneg %p106
        %p310 = pneg %p130
        %p311 = pneg %p127
        %p312 = pneg %p151
        %p313 = pneg %p148
        %p314 = pneg %p177
        %p315 = pneg %p174
        %s316 = sand.u32 %s164, 1
        %s317 = scalar_lea.sflag [#allocation4], %s316
        %s318 = sand.u32 %s164, 1
        %s319 = smul.addr %s318, 8
        %s320 = scalar_lea.vmem [#allocation10], %s319
        %v321 = vld [vmem:[%s276] sm:$0xf]
        %v322 = vld [vmem:[%s276 + $0x4] sm:$0xf]
        %v323 = vld [vmem:[%s276 + $0x8] sm:$0xf]
        %v324 = vld [vmem:[%s276 + $0xc] sm:$0xf]
        %v325 = vld [vmem:[%s276 + $0x10] sm:$0xf]
        %v326 = vld [vmem:[%s276 + $0x14] sm:$0xf]
        %v327 = vld [vmem:[%s276 + $0x18] sm:$0xf]
        %v328 = vld [vmem:[%s276 + $0x1c] sm:$0xf]
        %v329 = vld [vmem:[%s276 + $0x20] sm:$0xf]
        %v330 = vld [vmem:[%s276 + $0x24] sm:$0xf]
        %v331 = vld [vmem:[%s276 + $0x28] sm:$0xf]
        %v332 = vld [vmem:[%s276 + $0x2c] sm:$0xf]
        %v333 = vld [vmem:[%s276 + $0x30] sm:$0xf]
        %v334 = vld [vmem:[%s276 + $0x34] sm:$0xf]
        %v335 = vld [vmem:[%s276 + $0x38] sm:$0xf]
        %s336 = scalar_lea.vmem %s276, 4 [#allocation2]
        %v337 = vld [vmem:[%s336] sm:$0xf]
        %v338 = vld [vmem:[%s336 + $0x4] sm:$0xf]
        %v339 = vld [vmem:[%s336 + $0x8] sm:$0xf]
        %v340 = vld [vmem:[%s336 + $0xc] sm:$0xf]
        %v341 = vld [vmem:[%s336 + $0x10] sm:$0xf]
        %v342 = vld [vmem:[%s336 + $0x14] sm:$0xf]
        %v343 = vld [vmem:[%s336 + $0x18] sm:$0xf]
        %v344 = vld [vmem:[%s336 + $0x1c] sm:$0xf]
        %v345 = vld [vmem:[%s336 + $0x20] sm:$0xf]
        %v346 = vld [vmem:[%s336 + $0x24] sm:$0xf]
        %v347 = vld [vmem:[%s336 + $0x28] sm:$0xf]
        %v348 = vld [vmem:[%s336 + $0x2c] sm:$0xf]
        %v349 = vld [vmem:[%s336 + $0x30] sm:$0xf]
        %v350 = vld [vmem:[%s336 + $0x34] sm:$0xf]
        %v351 = vld [vmem:[%s336 + $0x38] sm:$0xf]
        %s352 = scalar_lea.vmem %s276, 8 [#allocation2]
        %v353 = vld [vmem:[%s352] sm:$0xf]
        %v354 = vld [vmem:[%s352 + $0x4] sm:$0xf]
        %v355 = vld [vmem:[%s352 + $0x8] sm:$0xf]
        %v356 = vld [vmem:[%s352 + $0xc] sm:$0xf]
        %v357 = vld [vmem:[%s352 + $0x10] sm:$0xf]
        %v358 = vld [vmem:[%s352 + $0x14] sm:$0xf]
        %v359 = vld [vmem:[%s352 + $0x18] sm:$0xf]
        %v360 = vld [vmem:[%s352 + $0x1c] sm:$0xf]
        %v361 = vld [vmem:[%s352 + $0x20] sm:$0xf]
        %v362 = vld [vmem:[%s352 + $0x24] sm:$0xf]
        %v363 = vld [vmem:[%s352 + $0x28] sm:$0xf]
        %v364 = vld [vmem:[%s352 + $0x2c] sm:$0xf]
        %v365 = vld [vmem:[%s352 + $0x30] sm:$0xf]
        %v366 = vld [vmem:[%s352 + $0x34] sm:$0xf]
        %v367 = vld [vmem:[%s352 + $0x38] sm:$0xf]
        %s368 = scalar_lea.vmem %s276, 12 [#allocation2]
        %v369 = vld [vmem:[%s368] sm:$0xf]
        %v370 = vld [vmem:[%s368 + $0x4] sm:$0xf]
        %v371 = vld [vmem:[%s368 + $0x8] sm:$0xf]
        %v372 = vld [vmem:[%s368 + $0xc] sm:$0xf]
        %v373 = vld [vmem:[%s368 + $0x10] sm:$0xf]
        %v374 = vld [vmem:[%s368 + $0x14] sm:$0xf]
        %v375 = vld [vmem:[%s368 + $0x18] sm:$0xf]
        %v376 = vld [vmem:[%s368 + $0x1c] sm:$0xf]
        %v377 = vld [vmem:[%s368 + $0x20] sm:$0xf]
        %v378 = vld [vmem:[%s368 + $0x24] sm:$0xf]
        %v379 = vld [vmem:[%s368 + $0x28] sm:$0xf]
        %v380 = vld [vmem:[%s368 + $0x2c] sm:$0xf]
        %v381 = vld [vmem:[%s368 + $0x30] sm:$0xf]
        %v382 = vld [vmem:[%s368 + $0x34] sm:$0xf]
        %v383 = vld [vmem:[%s368 + $0x38] sm:$0xf]
        %v399 = vunpack.c.l.b16 %v337
        %v400 = vunpack.c.l.b16 %v338
        %v401 = vunpack.c.l.b16 %v339
        %v402 = vunpack.c.l.b16 %v340
        %v403 = vunpack.c.l.b16 %v341
        %v404 = vunpack.c.l.b16 %v342
        %v405 = vunpack.c.l.b16 %v343
        %v406 = vunpack.c.l.b16 %v344
        %v407 = vunpack.c.l.b16 %v345
        %v408 = vunpack.c.l.b16 %v346
        %v409 = vunpack.c.l.b16 %v347
        %v410 = vunpack.c.l.b16 %v348
        %v411 = vunpack.c.l.b16 %v349
        %v412 = vunpack.c.l.b16 %v350
        %v413 = vunpack.c.l.b16 %v351
        %v414 = vpack.c.b16 %v399, %v399
        %v415 = vpack.c.b16 %v400, %v400
        %v416 = vpack.c.b16 %v401, %v401
        %v417 = vpack.c.b16 %v402, %v402
        %v418 = vpack.c.b16 %v403, %v403
        %v419 = vpack.c.b16 %v404, %v404
        %v420 = vpack.c.b16 %v405, %v405
        %v421 = vpack.c.b16 %v406, %v406
        %v422 = vpack.c.b16 %v407, %v407
        %v423 = vpack.c.b16 %v408, %v408
        %v424 = vpack.c.b16 %v409, %v409
        %v425 = vpack.c.b16 %v410, %v410
        %v426 = vpack.c.b16 %v411, %v411
        %v427 = vpack.c.b16 %v412, %v412
        %v428 = vpack.c.b16 %v413, %v413
        %429 = vrot.lane.b32.xlu0 %v414, 32
        %v430 = vpop.permute.xlu0 %429
        %431 = vrot.lane.b32.xlu0 %v415, 32
        %v432 = vpop.permute.xlu0 %431
        %433 = vrot.lane.b32.xlu0 %v416, 32
        %v434 = vpop.permute.xlu0 %433
        %435 = vrot.lane.b32.xlu0 %v417, 32
        %v436 = vpop.permute.xlu0 %435
        %437 = vrot.lane.b32.xlu0 %v418, 32
        %v438 = vpop.permute.xlu0 %437
        %439 = vrot.lane.b32.xlu0 %v419, 32
        %v440 = vpop.permute.xlu0 %439
        %441 = vrot.lane.b32.xlu0 %v420, 32
        %v442 = vpop.permute.xlu0 %441
        %443 = vrot.lane.b32.xlu0 %v421, 32
        %v444 = vpop.permute.xlu0 %443
        %445 = vrot.lane.b32.xlu0 %v422, 32
        %v446 = vpop.permute.xlu0 %445
        %447 = vrot.lane.b32.xlu0 %v423, 32
        %v448 = vpop.permute.xlu0 %447
        %449 = vrot.lane.b32.xlu0 %v424, 32
        %v450 = vpop.permute.xlu0 %449
        %451 = vrot.lane.b32.xlu0 %v425, 32
        %v452 = vpop.permute.xlu0 %451
        %453 = vrot.lane.b32.xlu0 %v426, 32
        %v454 = vpop.permute.xlu0 %453
        %455 = vrot.lane.b32.xlu0 %v427, 32
        %v456 = vpop.permute.xlu0 %455
        %457 = vrot.lane.b32.xlu0 %v428, 32
        %v458 = vpop.permute.xlu0 %457
        %v474 = vunpack.c.l.b16 %v353
        %v475 = vunpack.c.l.b16 %v354
        %v476 = vunpack.c.l.b16 %v355
        %v477 = vunpack.c.l.b16 %v356
        %v478 = vunpack.c.l.b16 %v357
        %v479 = vunpack.c.l.b16 %v358
        %v480 = vunpack.c.l.b16 %v359
        %v481 = vunpack.c.l.b16 %v360
        %v482 = vunpack.c.l.b16 %v361
        %v483 = vunpack.c.l.b16 %v362
        %v484 = vunpack.c.l.b16 %v363
        %v485 = vunpack.c.l.b16 %v364
        %v486 = vunpack.c.l.b16 %v365
        %v487 = vunpack.c.l.b16 %v366
        %v488 = vunpack.c.l.b16 %v367
        %v489 = vpack.c.b16 %v474, %v474
        %v490 = vpack.c.b16 %v475, %v475
        %v491 = vpack.c.b16 %v476, %v476
        %v492 = vpack.c.b16 %v477, %v477
        %v493 = vpack.c.b16 %v478, %v478
        %v494 = vpack.c.b16 %v479, %v479
        %v495 = vpack.c.b16 %v480, %v480
        %v496 = vpack.c.b16 %v481, %v481
        %v497 = vpack.c.b16 %v482, %v482
        %v498 = vpack.c.b16 %v483, %v483
        %v499 = vpack.c.b16 %v484, %v484
        %v500 = vpack.c.b16 %v485, %v485
        %v501 = vpack.c.b16 %v486, %v486
        %v502 = vpack.c.b16 %v487, %v487
        %v503 = vpack.c.b16 %v488, %v488
        %504 = vrot.lane.b32.xlu0 %v489, 64
        %v505 = vpop.permute.xlu0 %504
        %506 = vrot.lane.b32.xlu0 %v490, 64
        %v507 = vpop.permute.xlu0 %506
        %508 = vrot.lane.b32.xlu0 %v491, 64
        %v509 = vpop.permute.xlu0 %508
        %510 = vrot.lane.b32.xlu0 %v492, 64
        %v511 = vpop.permute.xlu0 %510
        %512 = vrot.lane.b32.xlu0 %v493, 64
        %v513 = vpop.permute.xlu0 %512
        %514 = vrot.lane.b32.xlu0 %v494, 64
        %v515 = vpop.permute.xlu0 %514
        %516 = vrot.lane.b32.xlu0 %v495, 64
        %v517 = vpop.permute.xlu0 %516
        %518 = vrot.lane.b32.xlu0 %v496, 64
        %v519 = vpop.permute.xlu0 %518
        %520 = vrot.lane.b32.xlu0 %v497, 64
        %v521 = vpop.permute.xlu0 %520
        %522 = vrot.lane.b32.xlu0 %v498, 64
        %v523 = vpop.permute.xlu0 %522
        %524 = vrot.lane.b32.xlu0 %v499, 64
        %v525 = vpop.permute.xlu0 %524
        %526 = vrot.lane.b32.xlu0 %v500, 64
        %v527 = vpop.permute.xlu0 %526
        %528 = vrot.lane.b32.xlu0 %v501, 64
        %v529 = vpop.permute.xlu0 %528
        %530 = vrot.lane.b32.xlu0 %v502, 64
        %v531 = vpop.permute.xlu0 %530
        %532 = vrot.lane.b32.xlu0 %v503, 64
        %v533 = vpop.permute.xlu0 %532
        %v549 = vunpack.c.l.b16 %v369
        %v550 = vunpack.c.l.b16 %v370
        %v551 = vunpack.c.l.b16 %v371
        %v552 = vunpack.c.l.b16 %v372
        %v553 = vunpack.c.l.b16 %v373
        %v554 = vunpack.c.l.b16 %v374
        %v555 = vunpack.c.l.b16 %v375
        %v556 = vunpack.c.l.b16 %v376
        %v557 = vunpack.c.l.b16 %v377
        %v558 = vunpack.c.l.b16 %v378
        %v559 = vunpack.c.l.b16 %v379
        %v560 = vunpack.c.l.b16 %v380
        %v561 = vunpack.c.l.b16 %v381
        %v562 = vunpack.c.l.b16 %v382
        %v563 = vunpack.c.l.b16 %v383
        %v564 = vpack.c.b16 %v549, %v549
        %v565 = vpack.c.b16 %v550, %v550
        %v566 = vpack.c.b16 %v551, %v551
        %v567 = vpack.c.b16 %v552, %v552
        %v568 = vpack.c.b16 %v553, %v553
        %v569 = vpack.c.b16 %v554, %v554
        %v570 = vpack.c.b16 %v555, %v555
        %v571 = vpack.c.b16 %v556, %v556
        %v572 = vpack.c.b16 %v557, %v557
        %v573 = vpack.c.b16 %v558, %v558
        %v574 = vpack.c.b16 %v559, %v559
        %v575 = vpack.c.b16 %v560, %v560
        %v576 = vpack.c.b16 %v561, %v561
        %v577 = vpack.c.b16 %v562, %v562
        %v578 = vpack.c.b16 %v563, %v563
        %579 = vrot.lane.b32.xlu0 %v564, 96
        %v580 = vpop.permute.xlu0 %579
        %581 = vrot.lane.b32.xlu0 %v565, 96
        %v582 = vpop.permute.xlu0 %581
        %583 = vrot.lane.b32.xlu0 %v566, 96
        %v584 = vpop.permute.xlu0 %583
        %585 = vrot.lane.b32.xlu0 %v567, 96
        %v586 = vpop.permute.xlu0 %585
        %587 = vrot.lane.b32.xlu0 %v568, 96
        %v588 = vpop.permute.xlu0 %587
        %589 = vrot.lane.b32.xlu0 %v569, 96
        %v590 = vpop.permute.xlu0 %589
        %591 = vrot.lane.b32.xlu0 %v570, 96
        %v592 = vpop.permute.xlu0 %591
        %593 = vrot.lane.b32.xlu0 %v571, 96
        %v594 = vpop.permute.xlu0 %593
        %595 = vrot.lane.b32.xlu0 %v572, 96
        %v596 = vpop.permute.xlu0 %595
        %597 = vrot.lane.b32.xlu0 %v573, 96
        %v598 = vpop.permute.xlu0 %597
        %599 = vrot.lane.b32.xlu0 %v574, 96
        %v600 = vpop.permute.xlu0 %599
        %601 = vrot.lane.b32.xlu0 %v575, 96
        %v602 = vpop.permute.xlu0 %601
        %603 = vrot.lane.b32.xlu0 %v576, 96
        %v604 = vpop.permute.xlu0 %603
        %605 = vrot.lane.b32.xlu0 %v577, 96
        %v606 = vpop.permute.xlu0 %605
        %607 = vrot.lane.b32.xlu0 %v578, 96
        %v608 = vpop.permute.xlu0 %607
        %vm609 = vcmask 261120
        %v612 = vsel %vm609, %v321, %v430
        %v615 = vsel %vm609, %v322, %v432
        %v618 = vsel %vm609, %v323, %v434
        %v621 = vsel %vm609, %v324, %v436
        %v624 = vsel %vm609, %v325, %v438
        %v627 = vsel %vm609, %v326, %v440
        %v630 = vsel %vm609, %v327, %v442
        %v633 = vsel %vm609, %v328, %v444
        %v636 = vsel %vm609, %v329, %v446
        %v639 = vsel %vm609, %v330, %v448
        %v642 = vsel %vm609, %v331, %v450
        %v645 = vsel %vm609, %v332, %v452
        %v648 = vsel %vm609, %v333, %v454
        %v651 = vsel %vm609, %v334, %v456
        %v654 = vsel %vm609, %v335, %v458
        %vm655 = vcmask 523264
        %v657 = vsel %vm655, %v612, %v505
        %v659 = vsel %vm655, %v615, %v507
        %v661 = vsel %vm655, %v618, %v509
        %v663 = vsel %vm655, %v621, %v511
        %v665 = vsel %vm655, %v624, %v513
        %v667 = vsel %vm655, %v627, %v515
        %v669 = vsel %vm655, %v630, %v517
        %v671 = vsel %vm655, %v633, %v519
        %v673 = vsel %vm655, %v636, %v521
        %v675 = vsel %vm655, %v639, %v523
        %v677 = vsel %vm655, %v642, %v525
        %v679 = vsel %vm655, %v645, %v527
        %v681 = vsel %vm655, %v648, %v529
        %v683 = vsel %vm655, %v651, %v531
        %v685 = vsel %vm655, %v654, %v533
        %vm686 = vcmask 785408
        %v688 = vsel %vm686, %v657, %v580
        %v690 = vsel %vm686, %v659, %v582
        %v692 = vsel %vm686, %v661, %v584
        %v694 = vsel %vm686, %v663, %v586
        %v696 = vsel %vm686, %v665, %v588
        %v698 = vsel %vm686, %v667, %v590
        %v700 = vsel %vm686, %v669, %v592
        %v702 = vsel %vm686, %v671, %v594
        %v704 = vsel %vm686, %v673, %v596
        %v706 = vsel %vm686, %v675, %v598
        %v708 = vsel %vm686, %v677, %v600
        %v710 = vsel %vm686, %v679, %v602
        %v712 = vsel %vm686, %v681, %v604
        %v714 = vsel %vm686, %v683, %v606
        %v716 = vsel %vm686, %v685, %v608
        %v717 = vld [vmem:[#allocation5] sm:$0xf]
        %v718 = vld [vmem:[#allocation5 + $0x4] sm:$0xf]
        %v719 = vld [vmem:[#allocation5 + $0x8] sm:$0xf]
        %v720 = vld [vmem:[#allocation5 + $0xc] sm:$0xf]
        %v721 = vld [vmem:[#allocation5 + $0x10] sm:$0xf]
        %v722 = vld [vmem:[#allocation5 + $0x14] sm:$0xf]
        %v723 = vld [vmem:[#allocation5 + $0x18] sm:$0xf]
        %v724 = vld [vmem:[#allocation5 + $0x1c] sm:$0xf]
        %v725 = vld [vmem:[#allocation5 + $0x20] sm:$0xf]
        %v726 = vld [vmem:[#allocation5 + $0x24] sm:$0xf]
        %v727 = vld [vmem:[#allocation5 + $0x28] sm:$0xf]
        %v728 = vld [vmem:[#allocation5 + $0x2c] sm:$0xf]
        %v729 = vld [vmem:[#allocation5 + $0x30] sm:$0xf]
        %v730 = vld [vmem:[#allocation5 + $0x34] sm:$0xf]
        %v731 = vld [vmem:[#allocation5 + $0x38] sm:$0xf]
        %v732 = vld [vmem:[#allocation5 + $0x3c] sm:$0xf]
        %v748 = vunpack.c.l.b16 %v688
        %v749 = vunpack.c.l.b16 %v690
        %v750 = vunpack.c.l.b16 %v692
        %v751 = vunpack.c.l.b16 %v694
        %v752 = vunpack.c.l.b16 %v696
        %v753 = vunpack.c.l.b16 %v698
        %v754 = vunpack.c.l.b16 %v700
        %v755 = vunpack.c.l.b16 %v702
        %v756 = vunpack.c.l.b16 %v704
        %v757 = vunpack.c.l.b16 %v706
        %v758 = vunpack.c.l.b16 %v708
        %v759 = vunpack.c.l.b16 %v710
        %v760 = vunpack.c.l.b16 %v712
        %v761 = vunpack.c.l.b16 %v714
        %v762 = vunpack.c.l.b16 %v716
        %v763 = vpack.c.b16 %v749, %v748
        %v764 = vpack.c.b16 %v751, %v750
        %v765 = vpack.c.b16 %v753, %v752
        %v766 = vpack.c.b16 %v755, %v754
        %v767 = vpack.c.b16 %v757, %v756
        %v768 = vpack.c.b16 %v759, %v758
        %v769 = vpack.c.b16 %v761, %v760
        %v770 = vpack.c.b16 %v762, %v762
        %v795 = vunpack.c.l.b16 %v717
        %v796 = vunpack.c.l.b16 %v718
        %v797 = vunpack.c.l.b16 %v719
        %v798 = vunpack.c.l.b16 %v720
        %v799 = vunpack.c.l.b16 %v721
        %v800 = vunpack.c.l.b16 %v722
        %v801 = vunpack.c.l.b16 %v723
        %v802 = vunpack.c.l.b16 %v724
        %v803 = vunpack.c.l.b16 %v725
        %v804 = vunpack.c.l.b16 %v726
        %v805 = vunpack.c.l.b16 %v727
        %v806 = vunpack.c.l.b16 %v728
        %v807 = vunpack.c.l.b16 %v729
        %v808 = vunpack.c.l.b16 %v730
        %v809 = vunpack.c.l.b16 %v731
        %v810 = vunpack.c.l.b16 %v732
        %v811 = vpack.c.b16 %v796, %v795
        %v812 = vpack.c.b16 %v798, %v797
        %v813 = vpack.c.b16 %v800, %v799
        %v814 = vpack.c.b16 %v802, %v801
        %v815 = vpack.c.b16 %v804, %v803
        %v816 = vpack.c.b16 %v806, %v805
        %v817 = vpack.c.b16 %v808, %v807
        %v818 = vpack.c.b16 %v810, %v809
        %827 = vmatpush.bf16.msra.mxu0 %v818
        %828 = vmatpush.bf16.msra.mxu0 %v817
        %829 = vmatpush.bf16.msra.mxu0 %v816
        %830 = vmatpush.bf16.msra.mxu0 %v815
        %831 = vmatpush.bf16.msra.mxu0 %v814
        %832 = vmatpush.bf16.msra.mxu0 %v813
        %833 = vmatpush.bf16.msra.mxu0 %v812
        %834 = vmatpush.bf16.msra.mxu0 %v811
        %835 = vmatmul.bf16.gmra.mxu0 %v763
        %v836 = vpop.f32.mrf.mxu0
        %v837 = vadd.f32 0.0, %v836
        %v838 = vpop.f32.mrf.mxu0
        %v839 = vadd.f32 0.0, %v838
        %840 = vmatmul.bf16.gmra.mxu0 %v764
        %v841 = vpop.f32.mrf.mxu0
        %v842 = vadd.f32 0.0, %v841
        %v843 = vpop.f32.mrf.mxu0
        %v844 = vadd.f32 0.0, %v843
        %845 = vmatmul.bf16.gmra.mxu0 %v765
        %v846 = vpop.f32.mrf.mxu0
        %v847 = vadd.f32 0.0, %v846
        %v848 = vpop.f32.mrf.mxu0
        %v849 = vadd.f32 0.0, %v848
        %850 = vmatmul.bf16.gmra.mxu0 %v766
        %v851 = vpop.f32.mrf.mxu0
        %v852 = vadd.f32 0.0, %v851
        %v853 = vpop.f32.mrf.mxu0
        %v854 = vadd.f32 0.0, %v853
        %855 = vmatmul.bf16.gmra.mxu0 %v767
        %v856 = vpop.f32.mrf.mxu0
        %v857 = vadd.f32 0.0, %v856
        %v858 = vpop.f32.mrf.mxu0
        %v859 = vadd.f32 0.0, %v858
        %860 = vmatmul.bf16.gmra.mxu0 %v768
        %v861 = vpop.f32.mrf.mxu0
        %v862 = vadd.f32 0.0, %v861
        %v863 = vpop.f32.mrf.mxu0
        %v864 = vadd.f32 0.0, %v863
        %865 = vmatmul.bf16.gmra.mxu0 %v769
        %v866 = vpop.f32.mrf.mxu0
        %v867 = vadd.f32 0.0, %v866
        %v868 = vpop.f32.mrf.mxu0
        %v869 = vadd.f32 0.0, %v868
        %870 = vmatmul.bf16.gmra.mxu0 %v770
        %v871 = vpop.f32.mrf.mxu0
        %v872 = vadd.f32 0.0, %v871
        %v873 = vpop.f32.mrf.mxu0
        %874 = vdwg.mxu0
        %v875 = vld [vmem:[#allocation7] sm:$0xff]
        %v876 = vld [vmem:[#allocation7 + $0x8] sm:$0x7f]
        %v879 = vrot.slane %v875, 1
        %v880 = vrot.slane %v875, 2
        %v881 = vrot.slane %v875, 3
        %v882 = vrot.slane %v875, 4
        %v883 = vrot.slane %v875, 5
        %v884 = vrot.slane %v875, 6
        %v885 = vrot.slane %v875, 7
        %v886 = vrot.slane %v876, 1
        %v887 = vrot.slane %v876, 2
        %v888 = vrot.slane %v876, 3
        %v889 = vrot.slane %v876, 4
        %v890 = vrot.slane %v876, 5
        %v891 = vrot.slane %v876, 6
        %v892 = vperm.slane %v875, 0
        %v893 = vperm.slane %v879, 0
        %v894 = vperm.slane %v880, 0
        %v895 = vperm.slane %v881, 0
        %v896 = vperm.slane %v882, 0
        %v897 = vperm.slane %v883, 0
        %v898 = vperm.slane %v884, 0
        %v899 = vperm.slane %v885, 0
        %v900 = vperm.slane %v876, 0
        %v901 = vperm.slane %v886, 0
        %v902 = vperm.slane %v887, 0
        %v903 = vperm.slane %v888, 0
        %v904 = vperm.slane %v889, 0
        %v905 = vperm.slane %v890, 0
        %v906 = vperm.slane %v891, 0
        %v922 = vadd.f32 %v837, %v892
        %v923 = vadd.f32 %v839, %v893
        %v924 = vadd.f32 %v842, %v894
        %v925 = vadd.f32 %v844, %v895
        %v926 = vadd.f32 %v847, %v896
        %v927 = vadd.f32 %v849, %v897
        %v928 = vadd.f32 %v852, %v898
        %v929 = vadd.f32 %v854, %v899
        %v930 = vadd.f32 %v857, %v900
        %v931 = vadd.f32 %v859, %v901
        %v932 = vadd.f32 %v862, %v902
        %v933 = vadd.f32 %v864, %v903
        %v934 = vadd.f32 %v867, %v904
        %v935 = vadd.f32 %v869, %v905
        %v936 = vadd.f32 %v872, %v906
        %v937 = vmax.f32 %v922, %v926
        %v938 = vmax.f32 %v923, %v927
        %v939 = vmax.f32 %v924, %v928
        %v940 = vmax.f32 %v925, %v929
        %v941 = vmax.f32 %v937, %v930
        %v942 = vmax.f32 %v938, %v931
        %v943 = vmax.f32 %v939, %v932
        %v944 = vmax.f32 %v940, %v933
        %v945 = vmax.f32 %v941, %v934
        %v946 = vmax.f32 %v942, %v935
        %v947 = vmax.f32 %v943, %v936
        %v948 = vmax.f32 %v945, %v946
        %v949 = vmax.f32 %v947, %v944
        %v950 = vmax.f32 %v948, %v949
        %v951 = vld [vmem:[%s2] sm:$0x1]
        %v953 = vperm.slane %v951, 0
        %v955 = vadd.f32 %v950, %v953
        %v956 = vmax.f32 %v955, 0.0
        %v957 = vpack.c.bf16 %v956, %v956
        %v958 = vld [vmem:[#allocation8] sm:$0xf]
        %v959 = vld [vmem:[#allocation8 + $0x4] sm:$0xf]
        %v960 = vld [vmem:[#allocation8 + $0x8] sm:$0xf]
        %v961 = vld [vmem:[#allocation8 + $0xc] sm:$0xf]
        %v962 = vld [vmem:[#allocation8 + $0x10] sm:$0xf]
        %v963 = vld [vmem:[#allocation8 + $0x14] sm:$0xf]
        %v964 = vld [vmem:[#allocation8 + $0x18] sm:$0xf]
        %v965 = vld [vmem:[#allocation8 + $0x1c] sm:$0xf]
        %v966 = vld [vmem:[#allocation8 + $0x20] sm:$0xf]
        %v967 = vld [vmem:[#allocation8 + $0x24] sm:$0xf]
        %v968 = vld [vmem:[#allocation8 + $0x28] sm:$0xf]
        %v969 = vld [vmem:[#allocation8 + $0x2c] sm:$0xf]
        %v970 = vld [vmem:[#allocation8 + $0x30] sm:$0xf]
        %v971 = vld [vmem:[#allocation8 + $0x34] sm:$0xf]
        %v972 = vld [vmem:[#allocation8 + $0x38] sm:$0xf]
        %v973 = vld [vmem:[#allocation8 + $0x3c] sm:$0xf]
        %v974 = vld [vmem:[%s5] sm:$0x1]
        %v976 = vperm.slane %v974, 0
        %v994 = vunpack.c.l.b16 %v958
        %v995 = vunpack.c.l.b16 %v959
        %v996 = vunpack.c.l.b16 %v960
        %v997 = vunpack.c.l.b16 %v961
        %v998 = vunpack.c.l.b16 %v962
        %v999 = vunpack.c.l.b16 %v963
        %v1000 = vunpack.c.l.b16 %v964
        %v1001 = vunpack.c.l.b16 %v965
        %v1002 = vunpack.c.l.b16 %v966
        %v1003 = vunpack.c.l.b16 %v967
        %v1004 = vunpack.c.l.b16 %v968
        %v1005 = vunpack.c.l.b16 %v969
        %v1006 = vunpack.c.l.b16 %v970
        %v1007 = vunpack.c.l.b16 %v971
        %v1008 = vunpack.c.l.b16 %v972
        %v1009 = vunpack.c.l.b16 %v973
        %v1010 = vpack.c.b16 %v995, %v994
        %v1011 = vpack.c.b16 %v997, %v996
        %v1012 = vpack.c.b16 %v999, %v998
        %v1013 = vpack.c.b16 %v1001, %v1000
        %v1014 = vpack.c.b16 %v1003, %v1002
        %v1015 = vpack.c.b16 %v1005, %v1004
        %v1016 = vpack.c.b16 %v1007, %v1006
        %v1017 = vpack.c.b16 %v1009, %v1008
        %1026 = vmatpush.bf16.msra.mxu0 %v1017
        %1027 = vmatpush.bf16.msra.mxu0 %v1016
        %1028 = vmatpush.bf16.msra.mxu0 %v1015
        %1029 = vmatpush.bf16.msra.mxu0 %v1014
        %1030 = vmatpush.bf16.msra.mxu0 %v1013
        %1031 = vmatpush.bf16.msra.mxu0 %v1012
        %1032 = vmatpush.bf16.msra.mxu0 %v1011
        %1033 = vmatpush.bf16.msra.mxu0 %v1010
        %1034 = vmatmul.bf16.gmra.mxu0 %v957
        %v1035 = vpop.f32.mrf.mxu0
        %v1036 = vadd.f32 %v976, %v1035
        %v1037 = vpop.f32.mrf.mxu0
        %1038 = vdwg.mxu0
        %1039 = vst [vmem:[%s320] sm:$0xff] %v1036
        %s1040 = sand.u32 %s164, 1
        %s1041 = scalar_lea.sflag [#allocation4], %s1040
        %s1042 = sand.u32 %s164, 1
        %s1043 = smul.addr %s1042, 8
        %s1044 = scalar_lea.vmem [#allocation10], %s1043
        // Predicated region
        $region61: #{tpu_custom_call.1} parent=43 // pred_check
          %p1045 = pneg %p174
        $region62: #{tpu_custom_call.1} parent=43 // pred_check_branch
          %1047 = sbr.rel (%p1045) target = $region64
        $region63: #{tpu_custom_call.1} parent=43 // pred_region
          %1049 = vsyncadd %s1041, 0
          %s1050 = smul.addr %s25, 8
          %s1051 = scalar_lea.hbm %s6, %s1050
          %s1053 = sshll.u32 %s1044, 4
          %s1054 = int_to_ptr.vmem [resolvable:$true] %s1053
          %s1055 = sshll.u32 %s1051, 4
          %s1056 = int_to_ptr.hbm [resolvable:$true] %s1055
          %1058 = dma.vmem_to_hbm [thread:$0]  %s1054, 128, %s1056, %s1041
        $region64: #{tpu_custom_call.1} parent=43 // pred_fallthru
          _
      $region44: #{tpu_custom_call.1} parent=5 // pred_fallthru
        _
      %p1059 = scmp.le.s32.totalorder 2, %s20
      // Predicated region
      $region65: #{tpu_custom_call.1} parent=5 // pred_check
        %p1060 = pneg %p1059
      $region66: #{tpu_custom_call.1} parent=5 // pred_check_branch
        %1062 = sbr.rel (%p1060) target = $region68
      $region67: #{tpu_custom_call.1} parent=5 // pred_region
        %s1063 = ssub.s32 %s20, 2
        // Predicated region
        $region69: #{tpu_custom_call.1} parent=67 // pred_check
          %p1064 = pneg %p180
        $region70: #{tpu_custom_call.1} parent=67 // pred_check_branch
          %1066 = sbr.rel (%p1064) target = $region72
        $region71: #{tpu_custom_call.1} parent=67 // pred_region
          %s1067 = sand.u32 %s165, 1
          %s1068 = scalar_lea.sflag [#allocation4], %s1067
          %s1069 = sand.u32 %s165, 1
          %s1070 = smul.addr %s1069, 8
          %s1071 = scalar_lea.vmem [#allocation10], %s1070
          %1073 = dma.done %s1068, 128
        $region72: #{tpu_custom_call.1} parent=67 // pred_fallthru
          _
      $region68: #{tpu_custom_call.1} parent=5 // pred_fallthru
        _
    $region6: #{tpu_custom_call.1} parent=1 // loop_footer
      %s24 = sadd.s32 1, %s20
    $region7: #{tpu_custom_call.1} parent=1 // loop_footer_branch
      %19 = sbr.rel target = $region3
    $region8: #{tpu_custom_call.1} parent=1 // loop_exit
      _
    %1074 = vsyncpa [#allocation3], 1
    %s1075 = scalar_lea.sflag [#allocation3], 1
    %1076 = vsyncpa %s1075, 1
    %1077 = vsyncpa [#allocation6], 1
    %1078 = vsyncpa [#allocation9], 1
    %1079 = vsyncpa [#allocation4], 1
    %s1080 = scalar_lea.sflag [#allocation4], 1
    %1081 = vsyncpa %s1080, 1

</llo_original>
